<compile_context>
chip_gen: v5e
topology: v5e:2x2
jax: 0.10.0
libtpu: 0.0.40
codegen_flags: <defaults>
</compile_context>

<pallas_src>
import functools

import jax
import jax.numpy as jnp
from jax.experimental import pallas as pl
from jax.experimental.pallas import tpu as pltpu

LANE = 128
SUBLANE = 8


def _round_up(x, m):
    return ((x + m - 1) // m) * m


def siamese_kernel(q1_ref, q2_ref,
                   w_enc_ref, b_enc_ref,
                   w1_ref, b1_ref,
                   w2t_ref, b2t_ref,
                   out_ref):
    # Shared encoder applied to both streams against the same resident bf16
    # weights (two dots; no per-step concat/VMEM copy).
    w_enc = w_enc_ref[...]          # (K, L_pad) bf16, resident / single-buffered
    b_enc = b_enc_ref[...]          # (1, L_pad) f32

    def encode(q_f32):
        z = jnp.dot(q_f32.astype(jnp.bfloat16), w_enc,
                    preferred_element_type=jnp.float32)
        return jnp.maximum(z + b_enc, 0.0)

    e1 = encode(q1_ref[...])        # (TB, L_pad) f32
    e2 = encode(q2_ref[...])

    # Similarity: element-wise absolute difference (f32 elementwise chain).
    dist = jnp.abs(e1 - e2)

    # Dense head: Linear -> ReLU -> Dropout(identity at inference) -> Linear -> Sigmoid
    h = jnp.dot(dist.astype(jnp.bfloat16), w1_ref[...],
                preferred_element_type=jnp.float32)
    h = jnp.maximum(h + b1_ref[...], 0.0)                     # (TB, L_pad) f32

    # Transposed, lane-dense head output: (C8, TB). TB and L_pad are multiples
    # of 128, so the transpose is tile-aligned and the output store is an
    # unmasked, lane-dense vst; sigmoid runs on C8*TB elems, not TB*128.
    h_t = jnp.transpose(h).astype(jnp.bfloat16)               # (L_pad, TB)
    logits_t = jnp.dot(w2t_ref[...], h_t,
                       preferred_element_type=jnp.float32)    # (C8, TB) f32
    out_ref[...] = jax.nn.sigmoid(logits_t + b2t_ref[...])


@functools.partial(jax.jit, static_argnames=("max_tile",))
def siamese_forward(q1, q2, params, max_tile=512):
    B, in_dim = q1.shape
    L = params["w1"].shape[0]
    C = params["w2"].shape[1]

    L_pad = _round_up(L, LANE)          # weight-side pad only (zero rows/cols)
    C8 = _round_up(C, SUBLANE)          # num_class padded to sublane, not lane

    # Batch tile: multiple of 128 (lane-dense transposed output, aligned
    # transpose), capped by max_tile. Sweep max_tile in {512, 1024, 2048}.
    tile_cap = max(LANE, _round_up(max_tile, LANE))
    TB = min(tile_cap, _round_up(B, LANE))
    B_pad = _round_up(B, TB)
    # Prefer >= 2 grid steps so the "parallel" axis can shard over v7x's 2 TCs.
    if B_pad // TB == 1 and TB >= 2 * LANE:
        TB //= 2
        B_pad = _round_up(B, TB)
    steps = B_pad // TB

    # Activations: no K pad (block K == full array dim); batch pad is an
    # identity when B is already tile-aligned (require aligned inputs upstream
    # to make this free at production sizes).
    pad_b = B_pad - B
    q1p = jnp.pad(q1, ((0, pad_b), (0, 0))) if pad_b else q1
    q2p = jnp.pad(q2, ((0, pad_b), (0, 0))) if pad_b else q2

    # Weights: pad once, cast the matmul operands to bf16 once (biases stay f32;
    # they join the f32 elementwise chain). Zero padding keeps the math exact.
    bf16 = jnp.bfloat16
    w_enc = jnp.pad(params["w_enc"], ((0, 0), (0, L_pad - L))).astype(bf16)
    b_enc = jnp.pad(params["b_enc"], ((0, 0), (0, L_pad - L)))
    w1 = jnp.pad(params["w1"], ((0, L_pad - L), (0, L_pad - L))).astype(bf16)
    b1 = jnp.pad(params["b1"], ((0, 0), (0, L_pad - L)))
    w2_t = jnp.pad(params["w2"], ((0, L_pad - L), (0, C8 - C))).astype(bf16).T  # (C8, L_pad)
    b2_t = jnp.pad(params["b2"], ((0, 0), (0, C8 - C))).T                       # (C8, 1)

    # Explicit VMEM budget -> vmem_limit_bytes (v7x physical VMEM is 64 MiB;
    # v5e default scoped limit is 16 MiB and must be raised for big TB).
    act_buf = 2 * 2 * TB * in_dim * 4                         # 2 streams x 2 buffers, f32
    out_buf = 2 * C8 * TB * 4                                 # double-buffered output tile
    wgt = ((in_dim * L_pad + L_pad * L_pad + C8 * L_pad) * 2  # bf16 resident weights
           + (2 * L_pad + C8) * 4)                            # f32 biases
    interm = 6 * TB * L_pad * 4                               # e1/e2/dist/h/h_t spill headroom
    vmem_limit = min(max(int(1.5 * (act_buf + out_buf + wgt + interm)), 32 << 20),
                     64 << 20)

    act_spec = pl.BlockSpec((TB, in_dim), lambda i: (i, 0))   # streamed, double-buffered
    resident = lambda: pl.BlockSpec(memory_space=pltpu.MemorySpace.VMEM)  # whole array, 1 buffer

    out = pl.pallas_call(
        siamese_kernel,
        out_shape=jax.ShapeDtypeStruct((C8, B_pad), jnp.float32),
        grid=(steps,),
        in_specs=[
            act_spec,                # q1 tile
            act_spec,                # q2 tile
            resident(),              # w_enc   (K, L_pad) bf16
            resident(),              # b_enc   (1, L_pad) f32
            resident(),              # w1      (L_pad, L_pad) bf16
            resident(),              # b1      (1, L_pad) f32
            resident(),              # w2^T    (C8, L_pad) bf16
            resident(),              # b2^T    (C8, 1) f32
        ],
        out_specs=pl.BlockSpec((C8, TB), lambda i: (0, i)),   # lane-dense, unmasked store
        compiler_params=pltpu.CompilerParams(
            dimension_semantics=("parallel",),                # 2-TC shard on v7x
            vmem_limit_bytes=vmem_limit),
    )(q1p, q2p, w_enc, b_enc, w1, b1, w2_t, b2_t)

    # (C8, B_pad) -> (B, C); padded classes / padded batch rows sliced away.
    return out[:C, :B].T


def init_params(key, in_dim, linear_size, num_class=1):
    k = jax.random.split(key, 6)
    scale_enc = 1.0 / jnp.sqrt(in_dim)
    scale_l = 1.0 / jnp.sqrt(linear_size)
    return {
        # encoder: Linear(in_dim, linear_size); weights stored (in, out)
        "w_enc": jax.random.uniform(k[0], (in_dim, linear_size), jnp.float32,
                                    -scale_enc, scale_enc),
        "b_enc": jax.random.uniform(k[1], (1, linear_size), jnp.float32,
                                    -scale_enc, scale_enc),
        # dense[0]: Linear(linear_size, linear_size)
        "w1": jax.random.uniform(k[2], (linear_size, linear_size), jnp.float32,
                                 -scale_l, scale_l),
        "b1": jax.random.uniform(k[3], (1, linear_size), jnp.float32,
                                 -scale_l, scale_l),
        # dense[3]: Linear(linear_size, num_class)
        "w2": jax.random.uniform(k[4], (linear_size, num_class), jnp.float32,
                                 -scale_l, scale_l),
        "b2": jax.random.uniform(k[5], (1, num_class), jnp.float32,
                                 -scale_l, scale_l),
    }


def reference_forward(q1, q2, params):
    def encode(q):
        return jnp.maximum(q @ params["w_enc"] + params["b_enc"], 0.0)
    dist = jnp.abs(encode(q1) - encode(q2))
    h = jnp.maximum(dist @ params["w1"] + params["b1"], 0.0)
    return jax.nn.sigmoid(h @ params["w2"] + params["b2"])


if __name__ == "__main__":
    B, IN_DIM, LINEAR_SIZE, NUM_CLASS = 8, 32, 32, 1

    key = jax.random.PRNGKey(0)
    kq1, kq2, kp = jax.random.split(key, 3)
    q1 = jax.random.normal(kq1, (B, IN_DIM), jnp.float32)
    q2 = jax.random.normal(kq2, (B, IN_DIM), jnp.float32)
    params = init_params(kp, IN_DIM, LINEAR_SIZE, NUM_CLASS)

    out = jax.block_until_ready(siamese_forward(q1, q2, params))
    ref = jax.block_until_ready(reference_forward(q1, q2, params))

    assert out.shape == (B, NUM_CLASS), out.shape
    # bf16 matmuls (f32 accumulate + f32 elementwise chain): loose tolerance.
    assert jnp.allclose(out, ref, atol=2e-2, rtol=2e-2), \
        f"max abs err = {jnp.max(jnp.abs(out - ref))}"
    print("KERNEL_OK")
</pallas_src>

<mosaic_0001>
module attributes {stable_mosaic.version = 11 : i64} {
  func.func @siamese_kernel(%arg0: i32, %arg1: memref<128x32xf32, #tpu.memory_space<vmem>>, %arg2: memref<128x32xf32, #tpu.memory_space<vmem>>, %arg3: memref<32x128xbf16, #tpu.memory_space<vmem>>, %arg4: memref<1x128xf32, #tpu.memory_space<vmem>>, %arg5: memref<128x128xbf16, #tpu.memory_space<vmem>>, %arg6: memref<1x128xf32, #tpu.memory_space<vmem>>, %arg7: memref<8x128xbf16, #tpu.memory_space<vmem>>, %arg8: memref<8x1xf32, #tpu.memory_space<vmem>>, %arg9: memref<8x128xf32, #tpu.memory_space<vmem>>) attributes {dimension_semantics = [#tpu.dimension_semantics<parallel>], iteration_bounds = array<i64: 1>, scalar_prefetch = 0 : i64, scratch_operands = 0 : i64, tpu.core_type = #tpu.core_type<tc>, window_params = [{transform_indices = @transform_0, window_bounds = array<i64: 128, 32>}, {transform_indices = @transform_1, window_bounds = array<i64: 128, 32>}, {pipeline_mode = #tpu.pipeline_mode<synchronous>, transform_indices = @transform_2, window_bounds = array<i64: 32, 128>}, {pipeline_mode = #tpu.pipeline_mode<synchronous>, transform_indices = @transform_3, window_bounds = array<i64: 1, 128>}, {pipeline_mode = #tpu.pipeline_mode<synchronous>, transform_indices = @transform_4, window_bounds = array<i64: 128, 128>}, {pipeline_mode = #tpu.pipeline_mode<synchronous>, transform_indices = @transform_5, window_bounds = array<i64: 1, 128>}, {pipeline_mode = #tpu.pipeline_mode<synchronous>, transform_indices = @transform_6, window_bounds = array<i64: 8, 128>}, {pipeline_mode = #tpu.pipeline_mode<synchronous>, transform_indices = @transform_7, window_bounds = array<i64: 8, 1>}, {transform_indices = @transform_8, window_bounds = array<i64: 8, 128>}]} {
    %c0 = arith.constant 0 : index
    %c0_0 = arith.constant 0 : index
    %0 = vector.load %arg3[%c0, %c0_0] : memref<32x128xbf16, #tpu.memory_space<vmem>>, vector<32x128xbf16>
    %c0_1 = arith.constant 0 : index
    %c0_2 = arith.constant 0 : index
    %1 = vector.load %arg4[%c0_1, %c0_2] : memref<1x128xf32, #tpu.memory_space<vmem>>, vector<1x128xf32>
    %c0_3 = arith.constant 0 : index
    %c0_4 = arith.constant 0 : index
    %2 = vector.load %arg1[%c0_3, %c0_4] : memref<128x32xf32, #tpu.memory_space<vmem>>, vector<128x32xf32>
    %3 = arith.truncf %2 : vector<128x32xf32> to vector<128x32xbf16>
    %cst = arith.constant dense<0.000000e+00> : vector<128x128xf32>
    %4 = tpu.matmul %3, %0, %cst {dimension_numbers = #tpu.dot_dimension_numbers<[1], [0], [0], [1], [0, 0, 1, 1], [], []>} : vector<128x32xbf16>, vector<32x128xbf16>, vector<128x128xf32> -> vector<128x128xf32>
    %5 = vector.broadcast %1 : vector<1x128xf32> to vector<128x128xf32>
    %6 = arith.addf %4, %5 : vector<128x128xf32>
    %cst_5 = arith.constant 0.000000e+00 : f32
    %7 = vector.broadcast %cst_5 : f32 to vector<128x128xf32>
    %8 = arith.maximumf %6, %7 : vector<128x128xf32>
    %c0_6 = arith.constant 0 : index
    %c0_7 = arith.constant 0 : index
    %9 = vector.load %arg2[%c0_6, %c0_7] : memref<128x32xf32, #tpu.memory_space<vmem>>, vector<128x32xf32>
    %10 = arith.truncf %9 : vector<128x32xf32> to vector<128x32xbf16>
    %cst_8 = arith.constant dense<0.000000e+00> : vector<128x128xf32>
    %11 = tpu.matmul %10, %0, %cst_8 {dimension_numbers = #tpu.dot_dimension_numbers<[1], [0], [0], [1], [0, 0, 1, 1], [], []>} : vector<128x32xbf16>, vector<32x128xbf16>, vector<128x128xf32> -> vector<128x128xf32>
    %12 = vector.broadcast %1 : vector<1x128xf32> to vector<128x128xf32>
    %13 = arith.addf %11, %12 : vector<128x128xf32>
    %cst_9 = arith.constant 0.000000e+00 : f32
    %14 = vector.broadcast %cst_9 : f32 to vector<128x128xf32>
    %15 = arith.maximumf %13, %14 : vector<128x128xf32>
    %16 = arith.subf %8, %15 : vector<128x128xf32>
    %17 = math.absf %16 : vector<128x128xf32>
    %18 = arith.truncf %17 : vector<128x128xf32> to vector<128x128xbf16>
    %c0_10 = arith.constant 0 : index
    %c0_11 = arith.constant 0 : index
    %19 = vector.load %arg5[%c0_10, %c0_11] : memref<128x128xbf16, #tpu.memory_space<vmem>>, vector<128x128xbf16>
    %cst_12 = arith.constant dense<0.000000e+00> : vector<128x128xf32>
    %20 = tpu.matmul %18, %19, %cst_12 {dimension_numbers = #tpu.dot_dimension_numbers<[1], [0], [0], [1], [0, 0, 1, 1], [], []>} : vector<128x128xbf16>, vector<128x128xbf16>, vector<128x128xf32> -> vector<128x128xf32>
    %c0_13 = arith.constant 0 : index
    %c0_14 = arith.constant 0 : index
    %21 = vector.load %arg6[%c0_13, %c0_14] : memref<1x128xf32, #tpu.memory_space<vmem>>, vector<1x128xf32>
    %22 = vector.broadcast %21 : vector<1x128xf32> to vector<128x128xf32>
    %23 = arith.addf %20, %22 : vector<128x128xf32>
    %cst_15 = arith.constant 0.000000e+00 : f32
    %24 = vector.broadcast %cst_15 : f32 to vector<128x128xf32>
    %25 = arith.maximumf %23, %24 : vector<128x128xf32>
    %26 = tpu.transpose %25, [1, 0] : vector<128x128xf32> -> vector<128x128xf32>
    %27 = arith.truncf %26 : vector<128x128xf32> to vector<128x128xbf16>
    %c0_16 = arith.constant 0 : index
    %c0_17 = arith.constant 0 : index
    %28 = vector.load %arg7[%c0_16, %c0_17] : memref<8x128xbf16, #tpu.memory_space<vmem>>, vector<8x128xbf16>
    %cst_18 = arith.constant dense<0.000000e+00> : vector<8x128xf32>
    %29 = tpu.matmul %28, %27, %cst_18 {dimension_numbers = #tpu.dot_dimension_numbers<[1], [0], [0], [1], [0, 0, 1, 1], [], []>} : vector<8x128xbf16>, vector<128x128xbf16>, vector<8x128xf32> -> vector<8x128xf32>
    %c0_19 = arith.constant 0 : index
    %c0_20 = arith.constant 0 : index
    %30 = vector.load %arg8[%c0_19, %c0_20] : memref<8x1xf32, #tpu.memory_space<vmem>>, vector<8x1xf32>
    %31 = vector.broadcast %30 : vector<8x1xf32> to vector<8x128xf32>
    %32 = arith.addf %29, %31 : vector<8x128xf32>
    %33 = arith.negf %32 : vector<8x128xf32>
    %34 = math.exp %33 : vector<8x128xf32>
    %cst_21 = arith.constant 1.000000e+00 : f32
    %35 = vector.broadcast %cst_21 : f32 to vector<8x128xf32>
    %36 = arith.addf %35, %34 : vector<8x128xf32>
    %37 = arith.divf %35, %36 : vector<8x128xf32>
    %c0_22 = arith.constant 0 : index
    %c0_23 = arith.constant 0 : index
    %38 = vector.load %arg9[%c0_22, %c0_23] : memref<8x128xf32, #tpu.memory_space<vmem>>, vector<8x128xf32>
    tpu.vector_store %arg9[%c0_22, %c0_23], %37 {strides = array<i32>} : memref<8x128xf32, #tpu.memory_space<vmem>>, vector<8x128xf32>,
    return
  }
  func.func @transform_0(%arg0: i32) -> (i32, i32) {
    %c0_i32 = arith.constant 0 : i32
    %c0_i32_0 = arith.constant 0 : i32
    return %arg0, %c0_i32 : i32, i32
  }
  func.func @transform_1(%arg0: i32) -> (i32, i32) {
    %c0_i32 = arith.constant 0 : i32
    %c0_i32_0 = arith.constant 0 : i32
    return %arg0, %c0_i32 : i32, i32
  }
  func.func @transform_2(%arg0: i32) -> (i32, i32) {
    %c0_i32 = arith.constant 0 : i32
    %c0_i32_0 = arith.constant 0 : i32
    %c0_i32_1 = arith.constant 0 : i32
    return %c0_i32, %c0_i32_0 : i32, i32
  }
  func.func @transform_3(%arg0: i32) -> (i32, i32) {
    %c0_i32 = arith.constant 0 : i32
    %c0_i32_0 = arith.constant 0 : i32
    %c0_i32_1 = arith.constant 0 : i32
    return %c0_i32, %c0_i32_0 : i32, i32
  }
  func.func @transform_4(%arg0: i32) -> (i32, i32) {
    %c0_i32 = arith.constant 0 : i32
    %c0_i32_0 = arith.constant 0 : i32
    %c0_i32_1 = arith.constant 0 : i32
    return %c0_i32, %c0_i32_0 : i32, i32
  }
  func.func @transform_5(%arg0: i32) -> (i32, i32) {
    %c0_i32 = arith.constant 0 : i32
    %c0_i32_0 = arith.constant 0 : i32
    %c0_i32_1 = arith.constant 0 : i32
    return %c0_i32, %c0_i32_0 : i32, i32
  }
  func.func @transform_6(%arg0: i32) -> (i32, i32) {
    %c0_i32 = arith.constant 0 : i32
    %c0_i32_0 = arith.constant 0 : i32
    %c0_i32_1 = arith.constant 0 : i32
    return %c0_i32, %c0_i32_0 : i32, i32
  }
  func.func @transform_7(%arg0: i32) -> (i32, i32) {
    %c0_i32 = arith.constant 0 : i32
    %c0_i32_0 = arith.constant 0 : i32
    %c0_i32_1 = arith.constant 0 : i32
    return %c0_i32, %c0_i32_0 : i32, i32
  }
  func.func @transform_8(%arg0: i32) -> (i32, i32) {
    %c0_i32 = arith.constant 0 : i32
    %c0_i32_0 = arith.constant 0 : i32
    return %c0_i32, %arg0 : i32, i32
  }
}

</mosaic_0001>

<llo_original>
// kernel: siamese_forward.1
$region0: #{siamese_forward.1}
  #allocation0 [shape = 'u32[]', space=smem, size = 0x4, offset = 0x4, fixed_abs, tag = 'smem constant byte address 0x4 - core index']
  #allocation1 [shape = 'u32[72,128]{1,0:T(1,128)}', space=vmem, size = 0x9000, scoped, tag = 'internal scratch']
  %s0 = inlined_call_operand.vmem [shape: f32[128,32], index: 0, kind: input, shape index: {}]
  %s1 = inlined_call_operand.vmem [shape: f32[128,32], index: 1, kind: input, shape index: {}]
  %s2 = inlined_call_operand.vmem [shape: bf16[32,128], index: 2, kind: input, shape index: {}]
  %s3 = inlined_call_operand.vmem [shape: f32[1,128], index: 3, kind: input, shape index: {}]
  %s4 = inlined_call_operand.vmem [shape: bf16[128,128], index: 4, kind: input, shape index: {}]
  %s5 = inlined_call_operand.vmem [shape: f32[1,128], index: 5, kind: input, shape index: {}]
  %s6 = inlined_call_operand.vmem [shape: bf16[8,128], index: 6, kind: input, shape index: {}]
  %s7 = inlined_call_operand.vmem [shape: f32[8,1], index: 7, kind: input, shape index: {}]
  %s8 = inlined_call_operand.vmem [shape: f32[8,128], index: 8, kind: output, shape index: {}]
  %s9 = sld [smem:[#allocation0]]
  $region42: #{siamese_forward.1} parent=0
    _
  %s11 = ssub.s32 1, %s9
  %s12 = scalar_select 0, %s11, %s9
  // Predicated region
  $region2: #{siamese_forward.1} parent=0 // pred_check
    _
  $region3: #{siamese_forward.1} parent=0 // pred_check_branch
    %14 = sbr.rel (0) target = $region5
  $region4: #{siamese_forward.1} parent=0 // pred_region
    _
  $region5: #{siamese_forward.1} parent=0 // pred_fallthru
    _
  // Predicated region
  $region6: #{siamese_forward.1} parent=0 // pred_check
    _
  $region7: #{siamese_forward.1} parent=0 // pred_check_branch
    %16 = sbr.rel (0) target = $region9
  $region8: #{siamese_forward.1} parent=0 // pred_region
    _
  $region9: #{siamese_forward.1} parent=0 // pred_fallthru
    _
  // Predicated region
  $region10: #{siamese_forward.1} parent=0 // pred_check
    _
  $region11: #{siamese_forward.1} parent=0 // pred_check_branch
    %18 = sbr.rel (0) target = $region13
  $region12: #{siamese_forward.1} parent=0 // pred_region
    _
  $region13: #{siamese_forward.1} parent=0 // pred_fallthru
    _
  // Predicated region
  $region14: #{siamese_forward.1} parent=0 // pred_check
    _
  $region15: #{siamese_forward.1} parent=0 // pred_check_branch
    %20 = sbr.rel (0) target = $region17
  $region16: #{siamese_forward.1} parent=0 // pred_region
    _
  $region17: #{siamese_forward.1} parent=0 // pred_fallthru
    _
  // Predicated region
  $region18: #{siamese_forward.1} parent=0 // pred_check
    _
  $region19: #{siamese_forward.1} parent=0 // pred_check_branch
    %22 = sbr.rel (0) target = $region21
  $region20: #{siamese_forward.1} parent=0 // pred_region
    _
  $region21: #{siamese_forward.1} parent=0 // pred_fallthru
    _
  // Predicated region
  $region22: #{siamese_forward.1} parent=0 // pred_check
    _
  $region23: #{siamese_forward.1} parent=0 // pred_check_branch
    %24 = sbr.rel (0) target = $region25
  $region24: #{siamese_forward.1} parent=0 // pred_region
    _
  $region25: #{siamese_forward.1} parent=0 // pred_fallthru
    _
  // Predicated region
  $region26: #{siamese_forward.1} parent=0 // pred_check
    _
  $region27: #{siamese_forward.1} parent=0 // pred_check_branch
    %26 = sbr.rel (0) target = $region29
  $region28: #{siamese_forward.1} parent=0 // pred_region
    _
  $region29: #{siamese_forward.1} parent=0 // pred_fallthru
    _
  // Predicated region
  $region30: #{siamese_forward.1} parent=0 // pred_check
    _
  $region31: #{siamese_forward.1} parent=0 // pred_check_branch
    %28 = sbr.rel (0) target = $region33
  $region32: #{siamese_forward.1} parent=0 // pred_region
    _
  $region33: #{siamese_forward.1} parent=0 // pred_fallthru
    _
  %v30 = vld [vmem:[%s2] sm:$0xf]
  %v31 = vld [vmem:[%s2 + $0x4] sm:$0xf]
  %v32 = vld [vmem:[%s2 + $0x8] sm:$0xf]
  %v33 = vld [vmem:[%s2 + $0xc] sm:$0xf]
  %v34 = vld [vmem:[%s3] sm:$0x1]
  %v35 = vld [vmem:[%s0] sm:$0xff]
  %v36 = vld [vmem:[%s0 + $0x8] sm:$0xff]
  %v37 = vld [vmem:[%s0 + $0x10] sm:$0xff]
  %v38 = vld [vmem:[%s0 + $0x18] sm:$0xff]
  %v39 = vld [vmem:[%s0 + $0x20] sm:$0xff]
  %v40 = vld [vmem:[%s0 + $0x28] sm:$0xff]
  %v41 = vld [vmem:[%s0 + $0x30] sm:$0xff]
  %v42 = vld [vmem:[%s0 + $0x38] sm:$0xff]
  %v43 = vld [vmem:[%s0 + $0x40] sm:$0xff]
  %v44 = vld [vmem:[%s0 + $0x48] sm:$0xff]
  %v45 = vld [vmem:[%s0 + $0x50] sm:$0xff]
  %v46 = vld [vmem:[%s0 + $0x58] sm:$0xff]
  %v47 = vld [vmem:[%s0 + $0x60] sm:$0xff]
  %v48 = vld [vmem:[%s0 + $0x68] sm:$0xff]
  %v49 = vld [vmem:[%s0 + $0x70] sm:$0xff]
  %v50 = vld [vmem:[%s0 + $0x78] sm:$0xff]
  %v51 = vpack.c.bf16 %v36, %v35
  %v52 = vpack.c.bf16 %v38, %v37
  %v53 = vpack.c.bf16 %v40, %v39
  %v54 = vpack.c.bf16 %v42, %v41
  %v55 = vpack.c.bf16 %v44, %v43
  %v56 = vpack.c.bf16 %v46, %v45
  %v57 = vpack.c.bf16 %v48, %v47
  %v58 = vpack.c.bf16 %v50, %v49
  %v60 = vperm.slane %v34, 0
  %v66 = vunpack.c.l.b16 %v30
  %v67 = vunpack.c.l.b16 %v31
  %v68 = vunpack.c.l.b16 %v32
  %v69 = vunpack.c.l.b16 %v33
  %v70 = vpack.c.b16 %v67, %v66
  %v71 = vpack.c.b16 %v69, %v68
  %vm74 = vcmask 261120
  %v76 = vsel %vm74, %v51, 0
  %v79 = vsel %vm74, %v52, 0
  %v82 = vsel %vm74, %v53, 0
  %v85 = vsel %vm74, %v54, 0
  %v88 = vsel %vm74, %v55, 0
  %v91 = vsel %vm74, %v56, 0
  %v94 = vsel %vm74, %v57, 0
  %v97 = vsel %vm74, %v58, 0
  %99 = vmatpush.bf16.msra.mxu0 0
  %100 = vmatpush.bf16.msra.mxu0 0
  %101 = vmatpush.bf16.msra.mxu0 0
  %102 = vmatpush.bf16.msra.mxu0 0
  %103 = vmatpush.bf16.msra.mxu0 0
  %104 = vmatpush.bf16.msra.mxu0 0
  %105 = vmatpush.bf16.msra.mxu0 %v71
  %106 = vmatpush.bf16.msra.mxu0 %v70
  %107 = vmatmul.bf16.gmra.mxu0 %v76
  %v108 = vpop.f32.mrf.mxu0
  %v109 = vadd.f32 %v60, %v108
  %v110 = vpop.f32.mrf.mxu0
  %v111 = vadd.f32 %v60, %v110
  %112 = vmatmul.bf16.gmra.mxu0 %v79
  %v113 = vpop.f32.mrf.mxu0
  %v114 = vadd.f32 %v60, %v113
  %v115 = vpop.f32.mrf.mxu0
  %v116 = vadd.f32 %v60, %v115
  %117 = vmatmul.bf16.gmra.mxu0 %v82
  %v118 = vpop.f32.mrf.mxu0
  %v119 = vadd.f32 %v60, %v118
  %v120 = vpop.f32.mrf.mxu0
  %v121 = vadd.f32 %v60, %v120
  %122 = vmatmul.bf16.gmra.mxu0 %v85
  %v123 = vpop.f32.mrf.mxu0
  %v124 = vadd.f32 %v60, %v123
  %v125 = vpop.f32.mrf.mxu0
  %v126 = vadd.f32 %v60, %v125
  %127 = vmatmul.bf16.gmra.mxu0 %v88
  %v128 = vpop.f32.mrf.mxu0
  %v129 = vadd.f32 %v60, %v128
  %v130 = vpop.f32.mrf.mxu0
  %v131 = vadd.f32 %v60, %v130
  %132 = vmatmul.bf16.gmra.mxu0 %v91
  %v133 = vpop.f32.mrf.mxu0
  %v134 = vadd.f32 %v60, %v133
  %v135 = vpop.f32.mrf.mxu0
  %v136 = vadd.f32 %v60, %v135
  %137 = vmatmul.bf16.gmra.mxu0 %v94
  %v138 = vpop.f32.mrf.mxu0
  %v139 = vadd.f32 %v60, %v138
  %v140 = vpop.f32.mrf.mxu0
  %v141 = vadd.f32 %v60, %v140
  %142 = vmatmul.bf16.gmra.mxu0 %v97
  %v143 = vpop.f32.mrf.mxu0
  %v144 = vadd.f32 %v60, %v143
  %v145 = vpop.f32.mrf.mxu0
  %v146 = vadd.f32 %v60, %v145
  %147 = vdwg.mxu0
  %v148 = vmax.f32 %v109, 0.0
  %v149 = vmax.f32 %v111, 0.0
  %v150 = vmax.f32 %v114, 0.0
  %v151 = vmax.f32 %v116, 0.0
  %v152 = vmax.f32 %v119, 0.0
  %v153 = vmax.f32 %v121, 0.0
  %v154 = vmax.f32 %v124, 0.0
  %v155 = vmax.f32 %v126, 0.0
  %v156 = vmax.f32 %v129, 0.0
  %v157 = vmax.f32 %v131, 0.0
  %v158 = vmax.f32 %v134, 0.0
  %v159 = vmax.f32 %v136, 0.0
  %v160 = vmax.f32 %v139, 0.0
  %v161 = vmax.f32 %v141, 0.0
  %v162 = vmax.f32 %v144, 0.0
  %v163 = vmax.f32 %v146, 0.0
  %v164 = vld [vmem:[%s1] sm:$0xff]
  %v165 = vld [vmem:[%s1 + $0x8] sm:$0xff]
  %v166 = vld [vmem:[%s1 + $0x10] sm:$0xff]
  %v167 = vld [vmem:[%s1 + $0x18] sm:$0xff]
  %v168 = vld [vmem:[%s1 + $0x20] sm:$0xff]
  %v169 = vld [vmem:[%s1 + $0x28] sm:$0xff]
  %v170 = vld [vmem:[%s1 + $0x30] sm:$0xff]
  %v171 = vld [vmem:[%s1 + $0x38] sm:$0xff]
  %v172 = vld [vmem:[%s1 + $0x40] sm:$0xff]
  %v173 = vld [vmem:[%s1 + $0x48] sm:$0xff]
  %v174 = vld [vmem:[%s1 + $0x50] sm:$0xff]
  %v175 = vld [vmem:[%s1 + $0x58] sm:$0xff]
  %v176 = vld [vmem:[%s1 + $0x60] sm:$0xff]
  %v177 = vld [vmem:[%s1 + $0x68] sm:$0xff]
  %v178 = vld [vmem:[%s1 + $0x70] sm:$0xff]
  %v179 = vld [vmem:[%s1 + $0x78] sm:$0xff]
  %v180 = vpack.c.bf16 %v165, %v164
  %v181 = vpack.c.bf16 %v167, %v166
  %v182 = vpack.c.bf16 %v169, %v168
  %v183 = vpack.c.bf16 %v171, %v170
  %v184 = vpack.c.bf16 %v173, %v172
  %v185 = vpack.c.bf16 %v175, %v174
  %v186 = vpack.c.bf16 %v177, %v176
  %v187 = vpack.c.bf16 %v179, %v178
  %v189 = vsel %vm74, %v180, 0
  %v192 = vsel %vm74, %v181, 0
  %v195 = vsel %vm74, %v182, 0
  %v198 = vsel %vm74, %v183, 0
  %v201 = vsel %vm74, %v184, 0
  %v204 = vsel %vm74, %v185, 0
  %v207 = vsel %vm74, %v186, 0
  %v210 = vsel %vm74, %v187, 0
  %212 = vmatpush.bf16.msra.mxu0 0
  %213 = vmatpush.bf16.msra.mxu0 0
  %214 = vmatpush.bf16.msra.mxu0 0
  %215 = vmatpush.bf16.msra.mxu0 0
  %216 = vmatpush.bf16.msra.mxu0 0
  %217 = vmatpush.bf16.msra.mxu0 0
  %218 = vmatpush.bf16.msra.mxu0 %v71
  %219 = vmatpush.bf16.msra.mxu0 %v70
  %220 = vmatmul.bf16.gmra.mxu0 %v189
  %v221 = vpop.f32.mrf.mxu0
  %v222 = vadd.f32 %v60, %v221
  %v223 = vpop.f32.mrf.mxu0
  %v224 = vadd.f32 %v60, %v223
  %225 = vmatmul.bf16.gmra.mxu0 %v192
  %v226 = vpop.f32.mrf.mxu0
  %v227 = vadd.f32 %v60, %v226
  %v228 = vpop.f32.mrf.mxu0
  %v229 = vadd.f32 %v60, %v228
  %230 = vmatmul.bf16.gmra.mxu0 %v195
  %v231 = vpop.f32.mrf.mxu0
  %v232 = vadd.f32 %v60, %v231
  %v233 = vpop.f32.mrf.mxu0
  %v234 = vadd.f32 %v60, %v233
  %235 = vmatmul.bf16.gmra.mxu0 %v198
  %v236 = vpop.f32.mrf.mxu0
  %v237 = vadd.f32 %v60, %v236
  %v238 = vpop.f32.mrf.mxu0
  %v239 = vadd.f32 %v60, %v238
  %240 = vmatmul.bf16.gmra.mxu0 %v201
  %v241 = vpop.f32.mrf.mxu0
  %v242 = vadd.f32 %v60, %v241
  %v243 = vpop.f32.mrf.mxu0
  %v244 = vadd.f32 %v60, %v243
  %245 = vmatmul.bf16.gmra.mxu0 %v204
  %v246 = vpop.f32.mrf.mxu0
  %v247 = vadd.f32 %v60, %v246
  %v248 = vpop.f32.mrf.mxu0
  %v249 = vadd.f32 %v60, %v248
  %250 = vmatmul.bf16.gmra.mxu0 %v207
  %v251 = vpop.f32.mrf.mxu0
  %v252 = vadd.f32 %v60, %v251
  %v253 = vpop.f32.mrf.mxu0
  %v254 = vadd.f32 %v60, %v253
  %255 = vmatmul.bf16.gmra.mxu0 %v210
  %v256 = vpop.f32.mrf.mxu0
  %v257 = vadd.f32 %v60, %v256
  %v258 = vpop.f32.mrf.mxu0
  %v259 = vadd.f32 %v60, %v258
  %260 = vdwg.mxu0
  %v261 = vmax.f32 %v222, 0.0
  %v262 = vmax.f32 %v224, 0.0
  %v263 = vmax.f32 %v227, 0.0
  %v264 = vmax.f32 %v229, 0.0
  %v265 = vmax.f32 %v232, 0.0
  %v266 = vmax.f32 %v234, 0.0
  %v267 = vmax.f32 %v237, 0.0
  %v268 = vmax.f32 %v239, 0.0
  %v269 = vmax.f32 %v242, 0.0
  %v270 = vmax.f32 %v244, 0.0
  %v271 = vmax.f32 %v247, 0.0
  %v272 = vmax.f32 %v249, 0.0
  %v273 = vmax.f32 %v252, 0.0
  %v274 = vmax.f32 %v254, 0.0
  %v275 = vmax.f32 %v257, 0.0
  %v276 = vmax.f32 %v259, 0.0
  %v277 = vsub.f32 %v148, %v261
  %v278 = vsub.f32 %v149, %v262
  %v279 = vsub.f32 %v150, %v263
  %v280 = vsub.f32 %v151, %v264
  %v281 = vsub.f32 %v152, %v265
  %v282 = vsub.f32 %v153, %v266
  %v283 = vsub.f32 %v154, %v267
  %v284 = vsub.f32 %v155, %v268
  %v285 = vsub.f32 %v156, %v269
  %v286 = vsub.f32 %v157, %v270
  %v287 = vsub.f32 %v158, %v271
  %v288 = vsub.f32 %v159, %v272
  %v289 = vsub.f32 %v160, %v273
  %v290 = vsub.f32 %v161, %v274
  %v291 = vsub.f32 %v162, %v275
  %v292 = vsub.f32 %v163, %v276
  %v293 = vand.u32 2147483647, %v277
  %v294 = vand.u32 2147483647, %v278
  %v295 = vand.u32 2147483647, %v279
  %v296 = vand.u32 2147483647, %v280
  %v297 = vand.u32 2147483647, %v281
  %v298 = vand.u32 2147483647, %v282
  %v299 = vand.u32 2147483647, %v283
  %v300 = vand.u32 2147483647, %v284
  %v301 = vand.u32 2147483647, %v285
  %v302 = vand.u32 2147483647, %v286
  %v303 = vand.u32 2147483647, %v287
  %v304 = vand.u32 2147483647, %v288
  %v305 = vand.u32 2147483647, %v289
  %v306 = vand.u32 2147483647, %v290
  %v307 = vand.u32 2147483647, %v291
  %v308 = vand.u32 2147483647, %v292
  %v309 = vpack.c.bf16 %v294, %v293
  %v310 = vpack.c.bf16 %v296, %v295
  %v311 = vpack.c.bf16 %v298, %v297
  %v312 = vpack.c.bf16 %v300, %v299
  %v313 = vpack.c.bf16 %v302, %v301
  %v314 = vpack.c.bf16 %v304, %v303
  %v315 = vpack.c.bf16 %v306, %v305
  %v316 = vpack.c.bf16 %v308, %v307
  %v317 = vld [vmem:[%s4] sm:$0xf]
  %v318 = vld [vmem:[%s4 + $0x4] sm:$0xf]
  %v319 = vld [vmem:[%s4 + $0x8] sm:$0xf]
  %v320 = vld [vmem:[%s4 + $0xc] sm:$0xf]
  %v321 = vld [vmem:[%s4 + $0x10] sm:$0xf]
  %v322 = vld [vmem:[%s4 + $0x14] sm:$0xf]
  %v323 = vld [vmem:[%s4 + $0x18] sm:$0xf]
  %v324 = vld [vmem:[%s4 + $0x1c] sm:$0xf]
  %v325 = vld [vmem:[%s4 + $0x20] sm:$0xf]
  %v326 = vld [vmem:[%s4 + $0x24] sm:$0xf]
  %v327 = vld [vmem:[%s4 + $0x28] sm:$0xf]
  %v328 = vld [vmem:[%s4 + $0x2c] sm:$0xf]
  %v329 = vld [vmem:[%s4 + $0x30] sm:$0xf]
  %v330 = vld [vmem:[%s4 + $0x34] sm:$0xf]
  %v331 = vld [vmem:[%s4 + $0x38] sm:$0xf]
  %v332 = vld [vmem:[%s4 + $0x3c] sm:$0xf]
  %v333 = vld [vmem:[%s5] sm:$0x1]
  %v335 = vperm.slane %v333, 0
  %v353 = vunpack.c.l.b16 %v317
  %v354 = vunpack.c.l.b16 %v318
  %v355 = vunpack.c.l.b16 %v319
  %v356 = vunpack.c.l.b16 %v320
  %v357 = vunpack.c.l.b16 %v321
  %v358 = vunpack.c.l.b16 %v322
  %v359 = vunpack.c.l.b16 %v323
  %v360 = vunpack.c.l.b16 %v324
  %v361 = vunpack.c.l.b16 %v325
  %v362 = vunpack.c.l.b16 %v326
  %v363 = vunpack.c.l.b16 %v327
  %v364 = vunpack.c.l.b16 %v328
  %v365 = vunpack.c.l.b16 %v329
  %v366 = vunpack.c.l.b16 %v330
  %v367 = vunpack.c.l.b16 %v331
  %v368 = vunpack.c.l.b16 %v332
  %v369 = vpack.c.b16 %v354, %v353
  %v370 = vpack.c.b16 %v356, %v355
  %v371 = vpack.c.b16 %v358, %v357
  %v372 = vpack.c.b16 %v360, %v359
  %v373 = vpack.c.b16 %v362, %v361
  %v374 = vpack.c.b16 %v364, %v363
  %v375 = vpack.c.b16 %v366, %v365
  %v376 = vpack.c.b16 %v368, %v367
  %385 = vmatpush.bf16.msra.mxu0 %v376
  %386 = vmatpush.bf16.msra.mxu0 %v375
  %387 = vmatpush.bf16.msra.mxu0 %v374
  %388 = vmatpush.bf16.msra.mxu0 %v373
  %389 = vmatpush.bf16.msra.mxu0 %v372
  %390 = vmatpush.bf16.msra.mxu0 %v371
  %391 = vmatpush.bf16.msra.mxu0 %v370
  %392 = vmatpush.bf16.msra.mxu0 %v369
  %393 = vmatmul.bf16.gmra.mxu0 %v309
  %v394 = vpop.f32.mrf.mxu0
  %v395 = vadd.f32 %v335, %v394
  %v396 = vpop.f32.mrf.mxu0
  %v397 = vadd.f32 %v335, %v396
  %398 = vmatmul.bf16.gmra.mxu0 %v310
  %v399 = vpop.f32.mrf.mxu0
  %v400 = vadd.f32 %v335, %v399
  %v401 = vpop.f32.mrf.mxu0
  %v402 = vadd.f32 %v335, %v401
  %403 = vmatmul.bf16.gmra.mxu0 %v311
  %v404 = vpop.f32.mrf.mxu0
  %v405 = vadd.f32 %v335, %v404
  %v406 = vpop.f32.mrf.mxu0
  %v407 = vadd.f32 %v335, %v406
  %408 = vmatmul.bf16.gmra.mxu0 %v312
  %v409 = vpop.f32.mrf.mxu0
  %v410 = vadd.f32 %v335, %v409
  %v411 = vpop.f32.mrf.mxu0
  %v412 = vadd.f32 %v335, %v411
  %413 = vmatmul.bf16.gmra.mxu0 %v313
  %v414 = vpop.f32.mrf.mxu0
  %v415 = vadd.f32 %v335, %v414
  %v416 = vpop.f32.mrf.mxu0
  %v417 = vadd.f32 %v335, %v416
  %418 = vmatmul.bf16.gmra.mxu0 %v314
  %v419 = vpop.f32.mrf.mxu0
  %v420 = vadd.f32 %v335, %v419
  %v421 = vpop.f32.mrf.mxu0
  %v422 = vadd.f32 %v335, %v421
  %423 = vmatmul.bf16.gmra.mxu0 %v315
  %v424 = vpop.f32.mrf.mxu0
  %v425 = vadd.f32 %v335, %v424
  %v426 = vpop.f32.mrf.mxu0
  %v427 = vadd.f32 %v335, %v426
  %428 = vmatmul.bf16.gmra.mxu0 %v316
  %v429 = vpop.f32.mrf.mxu0
  %v430 = vadd.f32 %v335, %v429
  %v431 = vpop.f32.mrf.mxu0
  %v432 = vadd.f32 %v335, %v431
  %433 = vdwg.mxu0
  %v434 = vmax.f32 %v395, 0.0
  %v435 = vmax.f32 %v397, 0.0
  %v436 = vmax.f32 %v400, 0.0
  %v437 = vmax.f32 %v402, 0.0
  %v438 = vmax.f32 %v405, 0.0
  %v439 = vmax.f32 %v407, 0.0
  %v440 = vmax.f32 %v410, 0.0
  %v441 = vmax.f32 %v412, 0.0
  %v442 = vmax.f32 %v415, 0.0
  %v443 = vmax.f32 %v417, 0.0
  %v444 = vmax.f32 %v420, 0.0
  %v445 = vmax.f32 %v422, 0.0
  %v446 = vmax.f32 %v425, 0.0
  %v447 = vmax.f32 %v427, 0.0
  %v448 = vmax.f32 %v430, 0.0
  %v449 = vmax.f32 %v432, 0.0
  %450 = vxpose.xlu0.b32.start [1/16] %v434, 128
  %451 = vxpose.xlu0.b32.cont [2/16] %v435, 128
  %452 = vxpose.xlu0.b32.cont [3/16] %v436, 128
  %453 = vxpose.xlu0.b32.cont [4/16] %v437, 128
  %454 = vxpose.xlu0.b32.cont [5/16] %v438, 128
  %455 = vxpose.xlu0.b32.cont [6/16] %v439, 128
  %456 = vxpose.xlu0.b32.cont [7/16] %v440, 128
  %457 = vxpose.xlu0.b32.cont [8/16] %v441, 128
  %458 = vxpose.xlu0.b32.cont [9/16] %v442, 128
  %459 = vxpose.xlu0.b32.cont [10/16] %v443, 128
  %460 = vxpose.xlu0.b32.cont [11/16] %v444, 128
  %461 = vxpose.xlu0.b32.cont [12/16] %v445, 128
  %462 = vxpose.xlu0.b32.cont [13/16] %v446, 128
  %463 = vxpose.xlu0.b32.cont [14/16] %v447, 128
  %464 = vxpose.xlu0.b32.cont [15/16] %v448, 128
  %465 = vxpose.xlu0.b32.end [16/16] %v449, 128
  %v466 = vpop.trf.xlu0
  %v467 = vpop.trf.xlu0
  %v468 = vpop.trf.xlu0
  %v469 = vpop.trf.xlu0
  %v470 = vpop.trf.xlu0
  %v471 = vpop.trf.xlu0
  %v472 = vpop.trf.xlu0
  %v473 = vpop.trf.xlu0
  %v474 = vpop.trf.xlu0
  %v475 = vpop.trf.xlu0
  %v476 = vpop.trf.xlu0
  %v477 = vpop.trf.xlu0
  %v478 = vpop.trf.xlu0
  %v479 = vpop.trf.xlu0
  %v480 = vpop.trf.xlu0
  %v481 = vpop.trf.xlu0
  %v482 = vpack.c.bf16 %v467, %v466
  %v483 = vpack.c.bf16 %v469, %v468
  %v484 = vpack.c.bf16 %v471, %v470
  %v485 = vpack.c.bf16 %v473, %v472
  %v486 = vpack.c.bf16 %v475, %v474
  %v487 = vpack.c.bf16 %v477, %v476
  %v488 = vpack.c.bf16 %v479, %v478
  %v489 = vpack.c.bf16 %v481, %v480
  %v490 = vld [vmem:[%s6] sm:$0xf]
  %v491 = vld [vmem:[%s7] sm:$0xff]
  %493 = vset.pattern.permute.xlu0 0
  %494 = vperm.xlu0 %493, %v491
  %v495 = vpop.permute.xlu0 %494
  %497 = vmatpush.bf16.msra.mxu0 %v489
  %498 = vmatpush.bf16.msra.mxu0 %v488
  %499 = vmatpush.bf16.msra.mxu0 %v487
  %500 = vmatpush.bf16.msra.mxu0 %v486
  %501 = vmatpush.bf16.msra.mxu0 %v485
  %502 = vmatpush.bf16.msra.mxu0 %v484
  %503 = vmatpush.bf16.msra.mxu0 %v483
  %504 = vmatpush.bf16.msra.mxu0 %v482
  %505 = vmatmul.bf16.gmra.mxu0 %v490
  %v506 = vpop.f32.mrf.mxu0
  %v507 = vadd.f32 %v495, %v506
  %v508 = vpop.f32.mrf.mxu0
  %509 = vdwg.mxu0
  %v510 = vxor.u32 %v507, 2147483648
  %v511 = vmul.f32 %v510, 1.442695
  %v512 = vpow.pop %v511
  %v513 = vadd.f32 %v512, 1.0
  %v514 = vrcp.pop %v513
  %v515 = vmul.f32 %v513, %v514
  %v516 = vsub.f32 1.0, %v515
  %v517 = vmul.f32 %v514, %v516
  %v518 = vadd.f32 %v514, %v517
  %vm519 = vweird.f32 %v513
  %vm520 = vweird.f32 %v514
  %vm521 = vmor %vm519, %vm520
  %v522 = vsel %vm521, %v514, %v518
  %v523 = vand.u32 2147483647, %v513
  %vm524 = vcmp.eq.f32.partialorder %v523, 8.507059e+37
  %v525 = vand.u32 %v513, 2147483648
  %v526 = vor.u32 1.1754944e-38, %v525
  %v527 = vsel %vm524, %v526, %v522
  %v528 = vmul.f32 1.0, %v527
  %529 = vst [vmem:[%s8] sm:$0xff] %v528
  // Predicated region
  $region34: #{siamese_forward.1} parent=0 // pred_check
    _
  $region35: #{siamese_forward.1} parent=0 // pred_check_branch
    %531 = sbr.rel (0) target = $region37
  $region36: #{siamese_forward.1} parent=0 // pred_region
    _
  $region37: #{siamese_forward.1} parent=0 // pred_fallthru
    _
  // Predicated region
  $region38: #{siamese_forward.1} parent=0 // pred_check
    _
  $region39: #{siamese_forward.1} parent=0 // pred_check_branch
    %533 = sbr.rel (0) target = $region41
  $region40: #{siamese_forward.1} parent=0 // pred_region
    _
  $region41: #{siamese_forward.1} parent=0 // pred_fallthru
    _

</llo_original>
